<compile_context>
chip_gen: v7x
topology: tpu7x:2x2x1
jax: 0.10.0
libtpu: 0.0.40
codegen_flags: <defaults>
</compile_context>

<pallas_src>
import jax
import jax.numpy as jnp
from jax.experimental import pallas as pl
from jax.experimental.pallas import tpu as pltpu


def _pick_tile(n, preferred, multiple):
    """Largest divisor of n that is <= preferred and a multiple of `multiple`.

    Falls back to the full extent n (which always satisfies the (8,128)
    BlockSpec rule) if no such divisor exists.
    """
    if n <= preferred:
        return n
    t = (preferred // multiple) * multiple
    while t >= multiple:
        if n % t == 0:
            return t
        t -= multiple
    return n


def _fused_forward_kernel(hidden_ref, w_afm_ref, b_afm_ref, w_vmr_ref, b_vmr_ref,
                          ebt_ref, template_ref, target_ref,
                          out_ref, ssq_ref,
                          v_scratch, acc_scratch):
    j = pl.program_id(2)
    nj = pl.num_programs(2)

    # Once per (b, T-tile): the two small linears (with bias) and the
    # squared-error accumulator reset.  v is cached in bf16 so the dominant
    # matmul needs no per-J-tile cast.
    @pl.when(j == 0)
    def _():
        h = jnp.dot(hidden_ref[0], w_afm_ref[...],
                    preferred_element_type=jnp.float32) + b_afm_ref[...]   # (tT, F)
        v = jnp.dot(h, w_vmr_ref[...],
                    preferred_element_type=jnp.float32) + b_vmr_ref[...]   # (tT, Vd)
        v_scratch[...] = v.astype(v_scratch.dtype)
        acc_scratch[...] = jnp.zeros_like(acc_scratch)

    # Dominant matmul: (tT, Vd) @ (Vd, tJ) in bf16 with f32 accumulation.
    o = jnp.dot(v_scratch[...], ebt_ref[0],
                preferred_element_type=jnp.float32)                        # (tT, tJ)
    o = o + template_ref[0]                                                # + (1, tJ)
    out_ref[0] = o.astype(out_ref.dtype)

    # Fused squared-error: reduce the tile (lane then sublane, keepdims) and
    # accumulate the (1,1) partial into the tiny resident accumulator.
    d = o - target_ref[0]
    part = jnp.sum(d * d, axis=1, keepdims=True)       # (tT, 1)  lane reduce
    part = jnp.sum(part, axis=0, keepdims=True)        # (1, 1)   sublane reduce
    acc_scratch[...] = acc_scratch[...] + part         # broadcast to (8, 128)

    # One unmasked lane-dense store per (b, T-tile); every element of the
    # (8,128) block holds the same partial sum.
    @pl.when(j == nj - 1)
    def _():
        ssq_ref[0, 0] = acc_scratch[...]


def face3dmm_wo_exp_forward(hidden_states, params, exp_base, template, vertice,
                            *, tile_t=256, tile_j=2048):
    """Fused forward + MSE loss.

    Returns (vertice_out, loss):
      vertice_out = template + einsum('ijk,iak->iaj', exp_base,
                                      vertice_map_r(audio_feature_map(hidden)))
      loss        = mean((vertice_out - vertice)**2)
    """
    B, T, A = hidden_states.shape
    F = params["w_afm"].shape[1]
    Vd = params["w_vmr"].shape[1]
    J = exp_base.shape[1]

    tT = _pick_tile(T, tile_t, 8)
    tJ = _pick_tile(J, tile_j, 128)
    nT = T // tT
    nJ = J // tJ

    # Pre-transpose exp_base to (B, Vd, J) and store in bf16: removes the
    # in-kernel transpose and halves that HBM read stream.
    ebt = jnp.swapaxes(exp_base, 1, 2).astype(jnp.bfloat16)

    vertice_out, ssq = pl.pallas_call(
        _fused_forward_kernel,
        out_shape=(jax.ShapeDtypeStruct((B, T, J), jnp.float32),
                   jax.ShapeDtypeStruct((B, nT, 8, 128), jnp.float32)),
        grid_spec=pltpu.PrefetchScalarGridSpec(
            num_scalar_prefetch=0,
            grid=(B, nT, nJ),
            in_specs=[
                pl.BlockSpec((1, tT, A), lambda b, t, j: (b, t, 0)),    # hidden_states
                pl.BlockSpec((A, F), lambda b, t, j: (0, 0)),           # audio_feature_map W
                pl.BlockSpec((1, F), lambda b, t, j: (0, 0)),           # audio_feature_map b
                pl.BlockSpec((F, Vd), lambda b, t, j: (0, 0)),          # vertice_map_r W
                pl.BlockSpec((1, Vd), lambda b, t, j: (0, 0)),          # vertice_map_r b
                pl.BlockSpec((1, Vd, tJ), lambda b, t, j: (b, 0, j)),   # exp_base^T (bf16)
                pl.BlockSpec((1, 1, tJ), lambda b, t, j: (b, 0, j)),    # template
                pl.BlockSpec((1, tT, tJ), lambda b, t, j: (b, t, j)),   # face_vertex target
            ],
            out_specs=[
                pl.BlockSpec((1, tT, tJ), lambda b, t, j: (b, t, j)),        # vertice_out
                pl.BlockSpec((1, 1, 8, 128), lambda b, t, j: (b, t, 0, 0)),  # ssq partials
            ],
            scratch_shapes=[
                pltpu.VMEM((tT, Vd), jnp.bfloat16),  # cached vertice_map_r output (bf16)
                pltpu.VMEM((8, 128), jnp.float32),   # squared-error accumulator
            ],
        ),
        compiler_params=pltpu.CompilerParams(
            dimension_semantics=("parallel", "parallel", "arbitrary"),
            vmem_limit_bytes=32 * 1024 * 1024,
        ),
    )(hidden_states, params["w_afm"], params["b_afm"],
      params["w_vmr"], params["b_vmr"], ebt, template, vertice)

    # Each (b, t) block of `ssq` holds its partial sum replicated over (8,128);
    # pick one element per block and reduce.
    loss = jnp.sum(ssq[:, :, 0, 0]) / jnp.float32(B * T * J)
    return vertice_out, loss


if __name__ == "__main__":
    # Small shapes consistent with the forward:
    # B=batch, T=frame_num, A=audio hidden (stand-in for 768),
    # F=args.feature_dim, Vd=args.vertice_dim(=64 -> exp_base branch), J=V*3.
    # J chosen as a multiple of 128 so the lane-dense J tiling is exercised
    # (grid = (2, 2, 3) with the demo tile sizes below).
    B, T, A, F, Vd, J = 2, 16, 64, 32, 64, 384

    key = jax.random.PRNGKey(0)
    ks = jax.random.split(key, 8)

    hidden_states = jax.random.normal(ks[0], (B, T, A), jnp.float32)   # wav2vec2 features
    template = jax.random.normal(ks[1], (B, 1, J), jnp.float32)        # batch['template']
    vertice = jax.random.normal(ks[2], (B, T, J), jnp.float32)         # batch['face_vertex']
    exp_base = jax.random.normal(ks[3], (B, J, Vd), jnp.float32)       # batch['exp_base']
    one_hot = jax.nn.one_hot(jnp.arange(B), 4)                         # unused (obj_vector deleted)

    # Deterministic parameter init.
    # NOTE: the original __init__ zero-inits vertice_map_r; random values are
    # used here so the kernel's matmul path is actually exercised.
    params = dict(
        w_afm=0.05 * jax.random.normal(ks[4], (A, F), jnp.float32),
        b_afm=0.05 * jax.random.normal(ks[5], (1, F), jnp.float32),
        w_vmr=0.05 * jax.random.normal(ks[6], (F, Vd), jnp.float32),
        b_vmr=0.05 * jax.random.normal(ks[7], (1, Vd), jnp.float32),
    )

    # Small tiles to exercise the multi-tile (T, J) grid and the pl.when paths.
    vertice_out, loss = face3dmm_wo_exp_forward(
        hidden_states, params, exp_base, template, vertice, tile_t=8, tile_j=128)
    jax.block_until_ready((vertice_out, loss))

    # Plain-JAX reference (same bf16 rounding of the big-matmul operands as the kernel).
    h_ref = hidden_states @ params["w_afm"] + params["b_afm"]
    v_ref = h_ref @ params["w_vmr"] + params["b_vmr"]
    eb_bf = exp_base.astype(jnp.bfloat16).astype(jnp.float32)
    v_bf = v_ref.astype(jnp.bfloat16).astype(jnp.float32)
    out_ref = template + jnp.einsum("bjk,btk->btj", eb_bf, v_bf)
    loss_ref = jnp.mean((out_ref - vertice) ** 2)

    assert jnp.allclose(vertice_out, out_ref, atol=5e-3, rtol=5e-3), (
        float(jnp.max(jnp.abs(vertice_out - out_ref))))
    assert jnp.allclose(loss, loss_ref, atol=1e-4, rtol=1e-3), (float(loss), float(loss_ref))

    print("KERNEL_OK")
</pallas_src>

<mosaic_0001>
module attributes {stable_mosaic.version = 11 : i64} {
  func.func @_fused_forward_kernel(%arg0: i32, %arg1: i32, %arg2: i32, %arg3: memref<1x8x64xf32, #tpu.memory_space<vmem>>, %arg4: memref<64x32xf32, #tpu.memory_space<vmem>>, %arg5: memref<1x32xf32, #tpu.memory_space<vmem>>, %arg6: memref<32x64xf32, #tpu.memory_space<vmem>>, %arg7: memref<1x64xf32, #tpu.memory_space<vmem>>, %arg8: memref<1x64x128xbf16, #tpu.memory_space<vmem>>, %arg9: memref<1x1x128xf32, #tpu.memory_space<vmem>>, %arg10: memref<1x8x128xf32, #tpu.memory_space<vmem>>, %arg11: memref<1x8x128xf32, #tpu.memory_space<vmem>>, %arg12: memref<1x1x8x128xf32, #tpu.memory_space<vmem>>, %arg13: memref<8x64xbf16, #tpu.memory_space<vmem>>, %arg14: memref<8x128xf32, #tpu.memory_space<vmem>>) attributes {dimension_semantics = [#tpu.dimension_semantics<parallel>, #tpu.dimension_semantics<parallel>, #tpu.dimension_semantics<arbitrary>], iteration_bounds = array<i64: 2, 2, 3>, scalar_prefetch = 0 : i64, scratch_operands = 2 : i64, tpu.core_type = #tpu.core_type<tc>, window_params = [{transform_indices = @transform_0, window_bounds = array<i64: 1, 8, 64>}, {pipeline_mode = #tpu.pipeline_mode<synchronous>, transform_indices = @transform_1, window_bounds = array<i64: 64, 32>}, {pipeline_mode = #tpu.pipeline_mode<synchronous>, transform_indices = @transform_2, window_bounds = array<i64: 1, 32>}, {pipeline_mode = #tpu.pipeline_mode<synchronous>, transform_indices = @transform_3, window_bounds = array<i64: 32, 64>}, {pipeline_mode = #tpu.pipeline_mode<synchronous>, transform_indices = @transform_4, window_bounds = array<i64: 1, 64>}, {transform_indices = @transform_5, window_bounds = array<i64: 1, 64, 128>}, {transform_indices = @transform_6, window_bounds = array<i64: 1, 1, 128>}, {transform_indices = @transform_7, window_bounds = array<i64: 1, 8, 128>}, {transform_indices = @transform_8, window_bounds = array<i64: 1, 8, 128>}, {transform_indices = @transform_9, window_bounds = array<i64: 1, 1, 8, 128>}]} {
    %c0_i32 = arith.constant 0 : i32
    %0 = arith.cmpi eq, %arg2, %c0_i32 : i32
    %1 = arith.extui %0 : i1 to i32
    %c0_i32_0 = arith.constant 0 : i32
    %2 = arith.cmpi ne, %1, %c0_i32_0 : i32
    scf.if %2 {
      %c0_21 = arith.constant 0 : index
      %c0_22 = arith.constant 0 : index
      %c0_23 = arith.constant 0 : index
      %29 = vector.load %arg3[%c0_21, %c0_22, %c0_23] : memref<1x8x64xf32, #tpu.memory_space<vmem>>, vector<1x8x64xf32>
      %30 = vector.shape_cast %29 : vector<1x8x64xf32> to vector<8x64xf32>
      %c0_24 = arith.constant 0 : index
      %c0_25 = arith.constant 0 : index
      %31 = vector.load %arg4[%c0_24, %c0_25] : memref<64x32xf32, #tpu.memory_space<vmem>>, vector<64x32xf32>
      %cst_26 = arith.constant dense<0.000000e+00> : vector<8x32xf32>
      %32 = tpu.matmul %30, %31, %cst_26 {dimension_numbers = #tpu.dot_dimension_numbers<[1], [0], [0], [1], [0, 0, 1, 1], [], []>} : vector<8x64xf32>, vector<64x32xf32>, vector<8x32xf32> -> vector<8x32xf32>
      %c0_27 = arith.constant 0 : index
      %c0_28 = arith.constant 0 : index
      %33 = vector.load %arg5[%c0_27, %c0_28] : memref<1x32xf32, #tpu.memory_space<vmem>>, vector<1x32xf32>
      %34 = vector.broadcast %33 : vector<1x32xf32> to vector<8x32xf32>
      %35 = arith.addf %32, %34 : vector<8x32xf32>
      %c0_29 = arith.constant 0 : index
      %c0_30 = arith.constant 0 : index
      %36 = vector.load %arg6[%c0_29, %c0_30] : memref<32x64xf32, #tpu.memory_space<vmem>>, vector<32x64xf32>
      %cst_31 = arith.constant dense<0.000000e+00> : vector<8x64xf32>
      %37 = tpu.matmul %35, %36, %cst_31 {dimension_numbers = #tpu.dot_dimension_numbers<[1], [0], [0], [1], [0, 0, 1, 1], [], []>} : vector<8x32xf32>, vector<32x64xf32>, vector<8x64xf32> -> vector<8x64xf32>
      %c0_32 = arith.constant 0 : index
      %c0_33 = arith.constant 0 : index
      %38 = vector.load %arg7[%c0_32, %c0_33] : memref<1x64xf32, #tpu.memory_space<vmem>>, vector<1x64xf32>
      %39 = vector.broadcast %38 : vector<1x64xf32> to vector<8x64xf32>
      %40 = arith.addf %37, %39 : vector<8x64xf32>
      %41 = arith.truncf %40 : vector<8x64xf32> to vector<8x64xbf16>
      %c0_34 = arith.constant 0 : index
      %c0_35 = arith.constant 0 : index
      %42 = vector.load %arg13[%c0_34, %c0_35] : memref<8x64xbf16, #tpu.memory_space<vmem>>, vector<8x64xbf16>
      tpu.vector_store %arg13[%c0_34, %c0_35], %41 {strides = array<i32>} : memref<8x64xbf16, #tpu.memory_space<vmem>>, vector<8x64xbf16>,
      %cst_36 = arith.constant 0.000000e+00 : f32
      %43 = vector.broadcast %cst_36 : f32 to vector<8x128xf32>
      %c0_37 = arith.constant 0 : index
      %c0_38 = arith.constant 0 : index
      %44 = vector.load %arg14[%c0_37, %c0_38] : memref<8x128xf32, #tpu.memory_space<vmem>>, vector<8x128xf32>
      tpu.vector_store %arg14[%c0_37, %c0_38], %43 {strides = array<i32>} : memref<8x128xf32, #tpu.memory_space<vmem>>, vector<8x128xf32>,
    } else {
    }
    %c0 = arith.constant 0 : index
    %c0_1 = arith.constant 0 : index
    %3 = vector.load %arg13[%c0, %c0_1] : memref<8x64xbf16, #tpu.memory_space<vmem>>, vector<8x64xbf16>
    %c0_2 = arith.constant 0 : index
    %c0_3 = arith.constant 0 : index
    %c0_4 = arith.constant 0 : index
    %4 = vector.load %arg8[%c0_2, %c0_3, %c0_4] : memref<1x64x128xbf16, #tpu.memory_space<vmem>>, vector<1x64x128xbf16>
    %5 = vector.shape_cast %4 : vector<1x64x128xbf16> to vector<64x128xbf16>
    %cst = arith.constant dense<0.000000e+00> : vector<8x128xf32>
    %6 = tpu.matmul %3, %5, %cst {dimension_numbers = #tpu.dot_dimension_numbers<[1], [0], [0], [1], [0, 0, 1, 1], [], []>} : vector<8x64xbf16>, vector<64x128xbf16>, vector<8x128xf32> -> vector<8x128xf32>
    %c0_5 = arith.constant 0 : index
    %c0_6 = arith.constant 0 : index
    %c0_7 = arith.constant 0 : index
    %7 = vector.load %arg9[%c0_5, %c0_6, %c0_7] : memref<1x1x128xf32, #tpu.memory_space<vmem>>, vector<1x1x128xf32>
    %8 = vector.shape_cast %7 : vector<1x1x128xf32> to vector<1x128xf32>
    %9 = vector.broadcast %8 : vector<1x128xf32> to vector<8x128xf32>
    %10 = arith.addf %6, %9 : vector<8x128xf32>
    %c0_8 = arith.constant 0 : index
    %c0_9 = arith.constant 0 : index
    %c0_10 = arith.constant 0 : index
    %11 = vector.load %arg11[%c0_8, %c0_9, %c0_10] : memref<1x8x128xf32, #tpu.memory_space<vmem>>, vector<1x8x128xf32>
    %12 = vector.shape_cast %11 : vector<1x8x128xf32> to vector<8x128xf32>
    %13 = vector.shape_cast %10 : vector<8x128xf32> to vector<1x8x128xf32>
    tpu.vector_store %arg11[%c0_8, %c0_9, %c0_10], %13 {strides = array<i32>} : memref<1x8x128xf32, #tpu.memory_space<vmem>>, vector<1x8x128xf32>,
    %c0_11 = arith.constant 0 : index
    %c0_12 = arith.constant 0 : index
    %c0_13 = arith.constant 0 : index
    %14 = vector.load %arg10[%c0_11, %c0_12, %c0_13] : memref<1x8x128xf32, #tpu.memory_space<vmem>>, vector<1x8x128xf32>
    %15 = vector.shape_cast %14 : vector<1x8x128xf32> to vector<8x128xf32>
    %16 = arith.subf %10, %15 : vector<8x128xf32>
    %17 = arith.mulf %16, %16 : vector<8x128xf32>
    %cst_14 = arith.constant dense<0.000000e+00> : vector<8xf32>
    %18 = vector.multi_reduction <add>, %17, %cst_14 [1] : vector<8x128xf32> to vector<8xf32>
    %19 = vector.shape_cast %18 : vector<8xf32> to vector<8x1xf32>
    %cst_15 = arith.constant dense<0.000000e+00> : vector<1xf32>
    %20 = vector.multi_reduction <add>, %19, %cst_15 [0] : vector<8x1xf32> to vector<1xf32>
    %21 = vector.shape_cast %20 : vector<1xf32> to vector<1x1xf32>
    %c0_16 = arith.constant 0 : index
    %c0_17 = arith.constant 0 : index
    %22 = vector.load %arg14[%c0_16, %c0_17] : memref<8x128xf32, #tpu.memory_space<vmem>>, vector<8x128xf32>
    %23 = vector.broadcast %21 : vector<1x1xf32> to vector<8x128xf32>
    %24 = arith.addf %22, %23 : vector<8x128xf32>
    %c0_18 = arith.constant 0 : index
    %c0_19 = arith.constant 0 : index
    %25 = vector.load %arg14[%c0_18, %c0_19] : memref<8x128xf32, #tpu.memory_space<vmem>>, vector<8x128xf32>
    tpu.vector_store %arg14[%c0_18, %c0_19], %24 {strides = array<i32>} : memref<8x128xf32, #tpu.memory_space<vmem>>, vector<8x128xf32>,
    %c2_i32 = arith.constant 2 : i32
    %26 = arith.cmpi eq, %arg2, %c2_i32 : i32
    %27 = arith.extui %26 : i1 to i32
    %c0_i32_20 = arith.constant 0 : i32
    %28 = arith.cmpi ne, %27, %c0_i32_20 : i32
    scf.if %28 {
      %c0_21 = arith.constant 0 : index
      %c0_22 = arith.constant 0 : index
      %29 = vector.load %arg14[%c0_21, %c0_22] : memref<8x128xf32, #tpu.memory_space<vmem>>, vector<8x128xf32>
      %c0_23 = arith.constant 0 : index
      %c0_24 = arith.constant 0 : index
      %c0_25 = arith.constant 0 : index
      %c0_26 = arith.constant 0 : index
      %30 = vector.load %arg12[%c0_23, %c0_24, %c0_25, %c0_26] : memref<1x1x8x128xf32, #tpu.memory_space<vmem>>, vector<1x1x8x128xf32>
      %31 = vector.shape_cast %30 : vector<1x1x8x128xf32> to vector<8x128xf32>
      %32 = vector.shape_cast %29 : vector<8x128xf32> to vector<1x1x8x128xf32>
      tpu.vector_store %arg12[%c0_23, %c0_24, %c0_25, %c0_26], %32 {strides = array<i32>} : memref<1x1x8x128xf32, #tpu.memory_space<vmem>>, vector<1x1x8x128xf32>,
    } else {
    }
    return
  }
  func.func @transform_0(%arg0: i32, %arg1: i32, %arg2: i32) -> (i32, i32, i32) {
    %c0_i32 = arith.constant 0 : i32
    %c0_i32_0 = arith.constant 0 : i32
    return %arg0, %arg1, %c0_i32 : i32, i32, i32
  }
  func.func @transform_1(%arg0: i32, %arg1: i32, %arg2: i32) -> (i32, i32) {
    %c0_i32 = arith.constant 0 : i32
    %c0_i32_0 = arith.constant 0 : i32
    %c0_i32_1 = arith.constant 0 : i32
    return %c0_i32, %c0_i32_0 : i32, i32
  }
  func.func @transform_2(%arg0: i32, %arg1: i32, %arg2: i32) -> (i32, i32) {
    %c0_i32 = arith.constant 0 : i32
    %c0_i32_0 = arith.constant 0 : i32
    %c0_i32_1 = arith.constant 0 : i32
    return %c0_i32, %c0_i32_0 : i32, i32
  }
  func.func @transform_3(%arg0: i32, %arg1: i32, %arg2: i32) -> (i32, i32) {
    %c0_i32 = arith.constant 0 : i32
    %c0_i32_0 = arith.constant 0 : i32
    %c0_i32_1 = arith.constant 0 : i32
    return %c0_i32, %c0_i32_0 : i32, i32
  }
  func.func @transform_4(%arg0: i32, %arg1: i32, %arg2: i32) -> (i32, i32) {
    %c0_i32 = arith.constant 0 : i32
    %c0_i32_0 = arith.constant 0 : i32
    %c0_i32_1 = arith.constant 0 : i32
    return %c0_i32, %c0_i32_0 : i32, i32
  }
  func.func @transform_5(%arg0: i32, %arg1: i32, %arg2: i32) -> (i32, i32, i32) {
    %c0_i32 = arith.constant 0 : i32
    %c0_i32_0 = arith.constant 0 : i32
    return %arg0, %c0_i32, %arg2 : i32, i32, i32
  }
  func.func @transform_6(%arg0: i32, %arg1: i32, %arg2: i32) -> (i32, i32, i32) {
    %c0_i32 = arith.constant 0 : i32
    %c0_i32_0 = arith.constant 0 : i32
    return %arg0, %c0_i32, %arg2 : i32, i32, i32
  }
  func.func @transform_7(%arg0: i32, %arg1: i32, %arg2: i32) -> (i32, i32, i32) {
    %c0_i32 = arith.constant 0 : i32
    return %arg0, %arg1, %arg2 : i32, i32, i32
  }
  func.func @transform_8(%arg0: i32, %arg1: i32, %arg2: i32) -> (i32, i32, i32) {
    %c0_i32 = arith.constant 0 : i32
    return %arg0, %arg1, %arg2 : i32, i32, i32
  }
  func.func @transform_9(%arg0: i32, %arg1: i32, %arg2: i32) -> (i32, i32, i32, i32) {
    %c0_i32 = arith.constant 0 : i32
    %c0_i32_0 = arith.constant 0 : i32
    %c0_i32_1 = arith.constant 0 : i32
    return %arg0, %arg1, %c0_i32, %c0_i32_0 : i32, i32, i32, i32
  }
}

</mosaic_0001>

<llo_original>
// kernel: tpu_custom_call.1
$region0: #{tpu_custom_call.1}
  #allocation0 [shape = 'u32[]', space=smem, size = 0x4, offset = 0x4, fixed_abs, tag = 'smem constant byte address 0x4 - core index']
  #allocation1 [shape = 'u32[144,128]{1,0:T(1,128)}', space=vmem, size = 0x12000, scoped, tag = 'internal scratch']
  #allocation2 [shape = 'bf16[8,64]{1,0:T(8,128)(2,1)}', space=vmem, size = 0x800, scoped, tag = 'scratch operand']
  #allocation3 [shape = 'f32[8,128]{1,0:T(8,128)}', space=vmem, size = 0x1000, scoped, tag = 'scratch operand']
  %s0 = inlined_call_operand.hbm [shape: f32[2,16,64], index: 0, kind: input, shape index: {}]
  %s1 = inlined_call_operand.vmem [shape: f32[64,32], index: 1, kind: input, shape index: {}]
  %s2 = inlined_call_operand.vmem [shape: f32[1,32], index: 2, kind: input, shape index: {}]
  %s3 = inlined_call_operand.hbm [shape: f32[32,64], index: 3, kind: input, shape index: {}]
  %s4 = inlined_call_operand.vmem [shape: f32[1,64], index: 4, kind: input, shape index: {}]
  %s5 = inlined_call_operand.hbm [shape: bf16[2,64,384], index: 5, kind: input, shape index: {}]
  %s6 = inlined_call_operand.vmem [shape: f32[2,1,384], index: 6, kind: input, shape index: {}]
  %s7 = inlined_call_operand.vmem [shape: f32[2,16,384], index: 7, kind: input, shape index: {}]
  %s8 = inlined_call_operand.hbm [shape: f32[2,16,384], index: 8, kind: output, shape index: {0}]
  %s9 = inlined_call_operand.hbm [shape: f32[2,2,8,128], index: 9, kind: output, shape index: {1}]
  %10 = xla_tuple %s8, %s9
  %s11 = sld [smem:[#allocation0]]
  $region93: #{tpu_custom_call.1} parent=0
    _
  %s13 = ssub.s32 1, %s11
  %s14 = scalar_select 0, %s13, %s11
  $region1: #{tpu_custom_call.1} parent=0
    #allocation4 [shape = 'u8[8192]{0}', space=vmem, size = 0x2000, scoped, tag = 'input window, operand 0']
    #allocation5 [shape = 's32[2]{0}', space=sflag, size = 0x8, scoped, tag = 'scoped memory for tpu_custom_call.1']
    #allocation6 [shape = 's32[2]{0}', space=sflag, size = 0x8, scoped, tag = 'scoped memory for tpu_custom_call.1']
    #allocation7 [shape = 'u8[16384]{0}', space=vmem, size = 0x4000, scoped, tag = 'input window, operand 3, single buffered']
    #allocation8 [shape = 's32[1]{0}', space=sflag, size = 0x4, scoped, tag = 'scoped memory for tpu_custom_call.1']
    #allocation9 [shape = 'u8[32768]{0}', space=vmem, size = 0x8000, scoped, tag = 'input window, operand 5']
    #allocation10 [shape = 'u8[8192]{0}', space=vmem, size = 0x2000, scoped, tag = 'output window, operand 0']
    #allocation11 [shape = 'u8[8192]{0}', space=vmem, size = 0x2000, scoped, tag = 'output window, operand 1']
    #allocation12 [shape = 's32[2]{0}', space=sflag, size = 0x8, scoped, tag = 'scoped memory for tpu_custom_call.1']
    %15 = vsyncpa [#allocation5], 0
    %s16 = scalar_lea.sflag [#allocation5], 1
    %17 = vsyncpa %s16, 0
    %18 = vsyncpa [#allocation8], 0
    %19 = vsyncpa [#allocation6], 0
    %s20 = scalar_lea.sflag [#allocation6], 1
    %21 = vsyncpa %s20, 0
    %22 = vsyncpa [#allocation12], 0
    %s23 = scalar_lea.sflag [#allocation12], 1
    %24 = vsyncpa %s23, 0
    loop: start=0, step=1, limit=14
    $region2: #{tpu_custom_call.1} parent=1 // loop_pre_header
      _
    $region3: #{tpu_custom_call.1} parent=1 // loop_header
      %s26 = sphi 0, %s30
      %p27 = scmp.ge.s32.totalorder %s26, 14
      %s33 = sphi 0, %s52
      %s34 = sphi 0, %s48
      %s35 = sphi 0, %s44
      %s36 = sphi 0, %s33
      %s37 = sphi 0, %s34
      %s38 = sphi 0, %s35
      %s39 = sphi 0, %s36
      %s40 = sphi 0, %s37
      %s41 = sphi 0, %s38
      %s57 = sphi 0, %s59
      %s60 = sphi 0, %s57
      %s61 = sphi 0, %s60
      %s77 = sphi 0, %s61
      %s81 = sphi 0, %s81
      %s83 = sphi 0, %s81
      %s84 = sphi 0, %s83
      %s98 = sphi 0, %s84
      %s102 = sphi 0, %s102
      %s104 = sphi 0, %s102
      %s105 = sphi 0, %s104
      %s119 = sphi 0, %s105
      %s123 = sphi 0, %s123
      %s125 = sphi 0, %s123
      %s126 = sphi 0, %s125
      %s140 = sphi 0, %s126
      %s144 = sphi 0, %s144
      %s146 = sphi 0, %s144
      %s147 = sphi 0, %s146
      %s161 = sphi 0, %s147
      %s169 = sphi 0, %s171
      %s172 = sphi 0, %s169
      %s173 = sphi 0, %s172
      %s189 = sphi 0, %s173
      %s197 = sphi 0, %s199
      %s200 = sphi 0, %s197
      %s201 = sphi 0, %s200
      %s217 = sphi 0, %s201
      %s227 = sphi 0, %s229
      %s230 = sphi 0, %s227
      %s231 = sphi 0, %s230
      %s247 = sphi 0, %s231
      %s257 = sphi 0, %s259
      %s260 = sphi 0, %s257
      %s261 = sphi 0, %s260
      %s277 = sphi 0, %s261
      %s285 = sphi 0, %s287
      %s288 = sphi 0, %s285
      %s289 = sphi 0, %s288
      %s305 = sphi 0, %s289
    $region4: #{tpu_custom_call.1} parent=1 // loop_header_branch
      %29 = sbr.rel (%p27) target = $region8
    $region5: #{tpu_custom_call.1} parent=1 // loop_body
      %s31 = ssub.s32 %s26, 1
      %s32 = ssub.s32 %s26, 2
      %s42 = sadd.s32 1, %s35
      %p43 = scmp.ge.s32.totalorder %s42, 3
      %s44 = scalar_select %p43, 0, %s42
      %s45 = sadd.s32 1, %s34
      %s46 = scalar_select %p43, %s45, %s34
      %p47 = scmp.ge.s32.totalorder %s46, 2
      %s48 = scalar_select %p47, 0, %s46
      %s49 = sadd.s32 1, %s33
      %s50 = scalar_select %p47, %s49, %s33
      %p51 = scmp.ge.s32.totalorder %s50, 2
      %s52 = scalar_select %p51, 0, %s50
      %s53 = ssub.s32 %s33, %s52
      %s54 = ssub.s32 %s34, %s48
      %s55 = sor.u32 %s53, %s54
      %p56 = scmp.eq.s32.totalorder %s55, 0
      %s58 = sadd.s32 %s57, 1
      %s59 = scalar_select %p56, %s57, %s58
      %p62 = pneg %p56
      %p63 = scmp.eq.s32.totalorder %s26, 11
      %p64 = por %p62, %p63
      %p65 = scmp.ne.s32.totalorder %s57, %s60
      %p66 = scmp.eq.s32.totalorder %s26, 0
      %p67 = por %p65, %p66
      %p68 = scmp.ne.s32.totalorder %s57, %s60
      %p69 = scmp.eq.s32.totalorder %s31, 11
      %p70 = por %p68, %p69
      %p71 = scmp.ne.s32.totalorder %s60, %s61
      %p72 = scmp.eq.s32.totalorder %s31, 0
      %p73 = por %p71, %p72
      %p74 = scmp.ne.s32.totalorder %s60, %s61
      %p75 = scmp.eq.s32.totalorder %s32, 11
      %p76 = por %p74, %p75
      %p78 = scmp.ne.s32.totalorder %s61, %s77
      %p79 = scmp.eq.s32.totalorder %s32, 0
      %p80 = por %p78, %p79
      %s82 = sadd.s32 %s81, 1
      %p85 = scmp.eq.s32.totalorder %s26, 11
      %p86 = scmp.ne.s32.totalorder %s81, %s83
      %p87 = scmp.eq.s32.totalorder %s26, 0
      %p88 = por %p86, %p87
      %p89 = scmp.ne.s32.totalorder %s81, %s83
      %p90 = scmp.eq.s32.totalorder %s31, 11
      %p91 = por %p89, %p90
      %p92 = scmp.ne.s32.totalorder %s83, %s84
      %p93 = scmp.eq.s32.totalorder %s31, 0
      %p94 = por %p92, %p93
      %p95 = scmp.ne.s32.totalorder %s83, %s84
      %p96 = scmp.eq.s32.totalorder %s32, 11
      %p97 = por %p95, %p96
      %p99 = scmp.ne.s32.totalorder %s84, %s98
      %p100 = scmp.eq.s32.totalorder %s32, 0
      %p101 = por %p99, %p100
      %s103 = sadd.s32 %s102, 1
      %p106 = scmp.eq.s32.totalorder %s26, 11
      %p107 = scmp.ne.s32.totalorder %s102, %s104
      %p108 = scmp.eq.s32.totalorder %s26, 0
      %p109 = por %p107, %p108
      %p110 = scmp.ne.s32.totalorder %s102, %s104
      %p111 = scmp.eq.s32.totalorder %s31, 11
      %p112 = por %p110, %p111
      %p113 = scmp.ne.s32.totalorder %s104, %s105
      %p114 = scmp.eq.s32.totalorder %s31, 0
      %p115 = por %p113, %p114
      %p116 = scmp.ne.s32.totalorder %s104, %s105
      %p117 = scmp.eq.s32.totalorder %s32, 11
      %p118 = por %p116, %p117
      %p120 = scmp.ne.s32.totalorder %s105, %s119
      %p121 = scmp.eq.s32.totalorder %s32, 0
      %p122 = por %p120, %p121
      %s124 = sadd.s32 %s123, 1
      %p127 = scmp.eq.s32.totalorder %s26, 11
      %p128 = scmp.ne.s32.totalorder %s123, %s125
      %p129 = scmp.eq.s32.totalorder %s26, 0
      %p130 = por %p128, %p129
      %p131 = scmp.ne.s32.totalorder %s123, %s125
      %p132 = scmp.eq.s32.totalorder %s31, 11
      %p133 = por %p131, %p132
      %p134 = scmp.ne.s32.totalorder %s125, %s126
      %p135 = scmp.eq.s32.totalorder %s31, 0
      %p136 = por %p134, %p135
      %p137 = scmp.ne.s32.totalorder %s125, %s126
      %p138 = scmp.eq.s32.totalorder %s32, 11
      %p139 = por %p137, %p138
      %p141 = scmp.ne.s32.totalorder %s126, %s140
      %p142 = scmp.eq.s32.totalorder %s32, 0
      %p143 = por %p141, %p142
      %s145 = sadd.s32 %s144, 1
      %p148 = scmp.eq.s32.totalorder %s26, 11
      %p149 = scmp.ne.s32.totalorder %s144, %s146
      %p150 = scmp.eq.s32.totalorder %s26, 0
      %p151 = por %p149, %p150
      %p152 = scmp.ne.s32.totalorder %s144, %s146
      %p153 = scmp.eq.s32.totalorder %s31, 11
      %p154 = por %p152, %p153
      %p155 = scmp.ne.s32.totalorder %s146, %s147
      %p156 = scmp.eq.s32.totalorder %s31, 0
      %p157 = por %p155, %p156
      %p158 = scmp.ne.s32.totalorder %s146, %s147
      %p159 = scmp.eq.s32.totalorder %s32, 11
      %p160 = por %p158, %p159
      %p162 = scmp.ne.s32.totalorder %s147, %s161
      %p163 = scmp.eq.s32.totalorder %s32, 0
      %p164 = por %p162, %p163
      %s165 = ssub.s32 %s33, %s52
      %s166 = ssub.s32 %s35, %s44
      %s167 = sor.u32 %s165, %s166
      %p168 = scmp.eq.s32.totalorder %s167, 0
      %s170 = sadd.s32 %s169, 1
      %s171 = scalar_select %p168, %s169, %s170
      %p174 = pneg %p168
      %p175 = scmp.eq.s32.totalorder %s26, 11
      %p176 = por %p174, %p175
      %p177 = scmp.ne.s32.totalorder %s169, %s172
      %p178 = scmp.eq.s32.totalorder %s26, 0
      %p179 = por %p177, %p178
      %p180 = scmp.ne.s32.totalorder %s169, %s172
      %p181 = scmp.eq.s32.totalorder %s31, 11
      %p182 = por %p180, %p181
      %p183 = scmp.ne.s32.totalorder %s172, %s173
      %p184 = scmp.eq.s32.totalorder %s31, 0
      %p185 = por %p183, %p184
      %p186 = scmp.ne.s32.totalorder %s172, %s173
      %p187 = scmp.eq.s32.totalorder %s32, 11
      %p188 = por %p186, %p187
      %p190 = scmp.ne.s32.totalorder %s173, %s189
      %p191 = scmp.eq.s32.totalorder %s32, 0
      %p192 = por %p190, %p191
      %s193 = ssub.s32 %s33, %s52
      %s194 = ssub.s32 %s35, %s44
      %s195 = sor.u32 %s193, %s194
      %p196 = scmp.eq.s32.totalorder %s195, 0
      %s198 = sadd.s32 %s197, 1
      %s199 = scalar_select %p196, %s197, %s198
      %p202 = pneg %p196
      %p203 = scmp.eq.s32.totalorder %s26, 11
      %p204 = por %p202, %p203
      %p205 = scmp.ne.s32.totalorder %s197, %s200
      %p206 = scmp.eq.s32.totalorder %s26, 0
      %p207 = por %p205, %p206
      %p208 = scmp.ne.s32.totalorder %s197, %s200
      %p209 = scmp.eq.s32.totalorder %s31, 11
      %p210 = por %p208, %p209
      %p211 = scmp.ne.s32.totalorder %s200, %s201
      %p212 = scmp.eq.s32.totalorder %s31, 0
      %p213 = por %p211, %p212
      %p214 = scmp.ne.s32.totalorder %s200, %s201
      %p215 = scmp.eq.s32.totalorder %s32, 11
      %p216 = por %p214, %p215
      %p218 = scmp.ne.s32.totalorder %s201, %s217
      %p219 = scmp.eq.s32.totalorder %s32, 0
      %p220 = por %p218, %p219
      %s221 = ssub.s32 %s33, %s52
      %s222 = ssub.s32 %s34, %s48
      %s223 = sor.u32 %s221, %s222
      %s224 = ssub.s32 %s35, %s44
      %s225 = sor.u32 %s223, %s224
      %p226 = scmp.eq.s32.totalorder %s225, 0
      %s228 = sadd.s32 %s227, 1
      %s229 = scalar_select %p226, %s227, %s228
      %p232 = pneg %p226
      %p233 = scmp.eq.s32.totalorder %s26, 11
      %p234 = por %p232, %p233
      %p235 = scmp.ne.s32.totalorder %s227, %s230
      %p236 = scmp.eq.s32.totalorder %s26, 0
      %p237 = por %p235, %p236
      %p238 = scmp.ne.s32.totalorder %s227, %s230
      %p239 = scmp.eq.s32.totalorder %s31, 11
      %p240 = por %p238, %p239
      %p241 = scmp.ne.s32.totalorder %s230, %s231
      %p242 = scmp.eq.s32.totalorder %s31, 0
      %p243 = por %p241, %p242
      %p244 = scmp.ne.s32.totalorder %s230, %s231
      %p245 = scmp.eq.s32.totalorder %s32, 11
      %p246 = por %p244, %p245
      %p248 = scmp.ne.s32.totalorder %s231, %s247
      %p249 = scmp.eq.s32.totalorder %s32, 0
      %p250 = por %p248, %p249
      %s251 = ssub.s32 %s33, %s52
      %s252 = ssub.s32 %s34, %s48
      %s253 = sor.u32 %s251, %s252
      %s254 = ssub.s32 %s35, %s44
      %s255 = sor.u32 %s253, %s254
      %p256 = scmp.eq.s32.totalorder %s255, 0
      %s258 = sadd.s32 %s257, 1
      %s259 = scalar_select %p256, %s257, %s258
      %p262 = pneg %p256
      %p263 = scmp.eq.s32.totalorder %s26, 11
      %p264 = por %p262, %p263
      %p265 = scmp.ne.s32.totalorder %s257, %s260
      %p266 = scmp.eq.s32.totalorder %s26, 0
      %p267 = por %p265, %p266
      %p268 = scmp.ne.s32.totalorder %s257, %s260
      %p269 = scmp.eq.s32.totalorder %s31, 11
      %p270 = por %p268, %p269
      %p271 = scmp.ne.s32.totalorder %s260, %s261
      %p272 = scmp.eq.s32.totalorder %s31, 0
      %p273 = por %p271, %p272
      %p274 = scmp.ne.s32.totalorder %s260, %s261
      %p275 = scmp.eq.s32.totalorder %s32, 11
      %p276 = por %p274, %p275
      %p278 = scmp.ne.s32.totalorder %s261, %s277
      %p279 = scmp.eq.s32.totalorder %s32, 0
      %p280 = por %p278, %p279
      %s281 = ssub.s32 %s33, %s52
      %s282 = ssub.s32 %s34, %s48
      %s283 = sor.u32 %s281, %s282
      %p284 = scmp.eq.s32.totalorder %s283, 0
      %s286 = sadd.s32 %s285, 1
      %s287 = scalar_select %p284, %s285, %s286
      %p290 = pneg %p284
      %p291 = scmp.eq.s32.totalorder %s26, 11
      %p292 = por %p290, %p291
      %p293 = scmp.ne.s32.totalorder %s285, %s288
      %p294 = scmp.eq.s32.totalorder %s26, 0
      %p295 = por %p293, %p294
      %p296 = scmp.ne.s32.totalorder %s285, %s288
      %p297 = scmp.eq.s32.totalorder %s31, 11
      %p298 = por %p296, %p297
      %p299 = scmp.ne.s32.totalorder %s288, %s289
      %p300 = scmp.eq.s32.totalorder %s31, 0
      %p301 = por %p299, %p300
      %p302 = scmp.ne.s32.totalorder %s288, %s289
      %p303 = scmp.eq.s32.totalorder %s32, 11
      %p304 = por %p302, %p303
      %p306 = scmp.ne.s32.totalorder %s289, %s305
      %p307 = scmp.eq.s32.totalorder %s32, 0
      %p308 = por %p306, %p307
      %p309 = scmp.le.s32.totalorder 1, %s26
      %p310 = scmp.lt.s32.totalorder %s26, 13
      %p311 = pnand %p309, %p310
      %p312 = pneg %p311
      // Predicated region
      $region9: #{tpu_custom_call.1} parent=5 // pred_check
        _
      $region10: #{tpu_custom_call.1} parent=5 // pred_check_branch
        %314 = sbr.rel (%p311) target = $region12
      $region11: #{tpu_custom_call.1} parent=5 // pred_region
        %s315 = ssub.s32 %s26, 1
        // Predicated region
        $region13: #{tpu_custom_call.1} parent=11 // pred_check
          %p316 = pneg %p94
        $region14: #{tpu_custom_call.1} parent=11 // pred_check_branch
          %318 = sbr.rel (%p316) target = $region16
        $region15: #{tpu_custom_call.1} parent=11 // pred_region
          _
        $region16: #{tpu_custom_call.1} parent=11 // pred_fallthru
          _
        // Predicated region
        $region17: #{tpu_custom_call.1} parent=11 // pred_check
          %p319 = pneg %p115
        $region18: #{tpu_custom_call.1} parent=11 // pred_check_branch
          %321 = sbr.rel (%p319) target = $region20
        $region19: #{tpu_custom_call.1} parent=11 // pred_region
          _
        $region20: #{tpu_custom_call.1} parent=11 // pred_fallthru
          _
        // Predicated region
        $region21: #{tpu_custom_call.1} parent=11 // pred_check
          %p322 = pneg %p136
        $region22: #{tpu_custom_call.1} parent=11 // pred_check_branch
          %324 = sbr.rel (%p322) target = $region24
        $region23: #{tpu_custom_call.1} parent=11 // pred_region
          %s326 = ssub.s32 512, 512
          %327 = vsyncadd [#allocation8], %s326
          %s328 = sshll.u32 [#allocation7], 4
          %s329 = int_to_ptr.vmem [resolvable:$true] %s328
          %334 = dma.hbm_to_vmem [thread:$0]  %s3, 512, %s329, [#allocation8], 128, 128, 8
        $region24: #{tpu_custom_call.1} parent=11 // pred_fallthru
          _
        // Predicated region
        $region25: #{tpu_custom_call.1} parent=11 // pred_check
          %p335 = pneg %p157
        $region26: #{tpu_custom_call.1} parent=11 // pred_check_branch
          %337 = sbr.rel (%p335) target = $region28
        $region27: #{tpu_custom_call.1} parent=11 // pred_region
          _
        $region28: #{tpu_custom_call.1} parent=11 // pred_fallthru
          _
      $region12: #{tpu_custom_call.1} parent=5 // pred_fallthru
        _
      %p338 = scmp.lt.s32.totalorder %s26, 12
      // Predicated region
      $region29: #{tpu_custom_call.1} parent=5 // pred_check
        %p339 = pneg %p338
      $region30: #{tpu_custom_call.1} parent=5 // pred_check_branch
        %341 = sbr.rel (%p339) target = $region32
      $region31: #{tpu_custom_call.1} parent=5 // pred_region
        // Predicated region
        $region33: #{tpu_custom_call.1} parent=31 // pred_check
          %p342 = pneg %p67
        $region34: #{tpu_custom_call.1} parent=31 // pred_check_branch
          %344 = sbr.rel (%p342) target = $region36
        $region35: #{tpu_custom_call.1} parent=31 // pred_region
          %s345 = sand.u32 %s26, 1
          %s346 = scalar_lea.sflag [#allocation5], %s345
          %s347 = sand.u32 %s57, 1
          %s348 = smul.addr %s347, 8
          %s349 = scalar_lea.vmem [#allocation4], %s348
          %s351 = ssub.s32 128, 128
          %352 = vsyncadd %s346, %s351
          %s353 = smul.addr %s33, 2
          %s354 = sadd.s32 %s34, %s353
          %s355 = smul.addr %s354, 128
          %s356 = scalar_lea.hbm %s0, %s355
          %s358 = sshll.u32 %s349, 4
          %s359 = int_to_ptr.vmem [resolvable:$true] %s358
          %361 = dma.hbm_to_vmem [thread:$0]  %s356, 128, %s359, %s346
        $region36: #{tpu_custom_call.1} parent=31 // pred_fallthru
          _
        // Predicated region
        $region37: #{tpu_custom_call.1} parent=31 // pred_check
          %p362 = pneg %p179
        $region38: #{tpu_custom_call.1} parent=31 // pred_check_branch
          %364 = sbr.rel (%p362) target = $region40
        $region39: #{tpu_custom_call.1} parent=31 // pred_region
          %s365 = sand.u32 %s26, 1
          %s366 = scalar_lea.sflag [#allocation5], %s365
          %s367 = sand.u32 %s169, 1
          %s368 = smul.addr %s367, 32
          %s369 = scalar_lea.vmem [#allocation9], %s368
          %s371 = ssub.s32 512, 512
          %372 = vsyncadd %s366, %s371
          %s373 = smul.addr %s33, 24
          %s374 = sadd.s32 %s35, %s373
          %s375 = smul.addr %s374, 64
          %s376 = scalar_lea.hbm %s5, %s375
          %s377 = sshll.u32 %s369, 4
          %s378 = int_to_ptr.vmem [resolvable:$true] %s377
          %383 = dma.hbm_to_vmem [thread:$0]  %s376, 512, %s378, %s366, 192, 64, 4
        $region40: #{tpu_custom_call.1} parent=31 // pred_fallthru
          _
        // Predicated region
        $region41: #{tpu_custom_call.1} parent=31 // pred_check
          %p384 = pneg %p207
        $region42: #{tpu_custom_call.1} parent=31 // pred_check_branch
          %386 = sbr.rel (%p384) target = $region44
        $region43: #{tpu_custom_call.1} parent=31 // pred_region
          %p387 = scmp.lt.s32.totalorder %s33, 1
          %s388 = scalar_select %p387, %s33, 1
          %p389 = scmp.lt.s32.totalorder %s35, 2
          %s390 = scalar_select %p389, %s35, 2
          %s391 = smul.addr %s388, 3
          %s392 = sadd.s32 %s390, %s391
          %s393 = scalar_lea.vmem %s6, %s392
        $region44: #{tpu_custom_call.1} parent=31 // pred_fallthru
          _
        // Predicated region
        $region45: #{tpu_custom_call.1} parent=31 // pred_check
          %p394 = pneg %p237
        $region46: #{tpu_custom_call.1} parent=31 // pred_check_branch
          %396 = sbr.rel (%p394) target = $region48
        $region47: #{tpu_custom_call.1} parent=31 // pred_region
          %p397 = scmp.lt.s32.totalorder %s33, 1
          %s398 = scalar_select %p397, %s33, 1
          %p399 = scmp.lt.s32.totalorder %s34, 1
          %s400 = scalar_select %p399, %s34, 1
          %p401 = scmp.lt.s32.totalorder %s35, 2
          %s402 = scalar_select %p401, %s35, 2
          %s403 = smul.addr %s400, 3
          %s404 = sadd.s32 %s402, %s403
          %s405 = smul.addr %s398, 6
          %s406 = sadd.s32 %s404, %s405
          %s407 = smul.addr %s406, 8
          %s408 = scalar_lea.vmem %s7, %s407
        $region48: #{tpu_custom_call.1} parent=31 // pred_fallthru
          _
      $region32: #{tpu_custom_call.1} parent=5 // pred_fallthru
        _
      %p409 = scmp.le.s32.totalorder 1, %s26
      %p410 = scmp.lt.s32.totalorder %s26, 13
      %p411 = pnand %p409, %p410
      %p412 = pneg %p411
      // Predicated region
      $region49: #{tpu_custom_call.1} parent=5 // pred_check
        _
      $region50: #{tpu_custom_call.1} parent=5 // pred_check_branch
        %414 = sbr.rel (%p411) target = $region52
      $region51: #{tpu_custom_call.1} parent=5 // pred_region
        %s415 = ssub.s32 %s26, 1
        %s416 = sand.u32 %s31, 1
        %s417 = scalar_lea.sflag [#allocation5], %s416
        %s418 = sand.u32 %s60, 1
        %s419 = smul.addr %s418, 8
        %s420 = scalar_lea.vmem [#allocation4], %s419
        // Predicated region
        $region53: #{tpu_custom_call.1} parent=51 // pred_check
          %p421 = pneg %p73
        $region54: #{tpu_custom_call.1} parent=51 // pred_check_branch
          %423 = sbr.rel (%p421) target = $region56
        $region55: #{tpu_custom_call.1} parent=51 // pred_region
          %424 = dma.done %s417, 128
        $region56: #{tpu_custom_call.1} parent=51 // pred_fallthru
          _
        // Predicated region
        $region57: #{tpu_custom_call.1} parent=51 // pred_check
          %p425 = pneg %p136
        $region58: #{tpu_custom_call.1} parent=51 // pred_check_branch
          %427 = sbr.rel (%p425) target = $region60
        $region59: #{tpu_custom_call.1} parent=51 // pred_region
          %428 = dma.done [#allocation8], 512
        $region60: #{tpu_custom_call.1} parent=51 // pred_fallthru
          _
        %s429 = sand.u32 %s31, 1
        %s430 = scalar_lea.sflag [#allocation5], %s429
        %s431 = sand.u32 %s172, 1
        %s432 = smul.addr %s431, 32
        %s433 = scalar_lea.vmem [#allocation9], %s432
        // Predicated region
        $region61: #{tpu_custom_call.1} parent=51 // pred_check
          %p434 = pneg %p185
        $region62: #{tpu_custom_call.1} parent=51 // pred_check_branch
          %436 = sbr.rel (%p434) target = $region64
        $region63: #{tpu_custom_call.1} parent=51 // pred_region
          %437 = dma.done %s430, 512
        $region64: #{tpu_custom_call.1} parent=51 // pred_fallthru
          _
        %s438 = sand.u32 %s31, 1
        %s439 = scalar_lea.sflag [#allocation5], %s438
        %s440 = sand.u32 %s60, 1
        %s441 = smul.addr %s440, 8
        %s442 = scalar_lea.vmem [#allocation4], %s441
        %p443 = pneg %p73
        %p444 = pneg %p70
        %p445 = pneg %p94
        %p446 = pneg %p91
        %p447 = pneg %p115
        %p448 = pneg %p112
        %p449 = pneg %p136
        %p450 = pneg %p133
        %p451 = pneg %p157
        %p452 = pneg %p154
        %s453 = sand.u32 %s31, 1
        %s454 = scalar_lea.sflag [#allocation5], %s453
        %s455 = sand.u32 %s172, 1
        %s456 = smul.addr %s455, 32
        %s457 = scalar_lea.vmem [#allocation9], %s456
        %p458 = pneg %p185
        %p459 = pneg %p182
        %p460 = scmp.lt.s32.totalorder %s36, 1
        %s461 = scalar_select %p460, %s36, 1
        %p462 = scmp.lt.s32.totalorder %s38, 2
        %s463 = scalar_select %p462, %s38, 2
        %s464 = smul.addr %s461, 3
        %s465 = sadd.s32 %s463, %s464
        %s466 = scalar_lea.vmem %s6, %s465
        %p467 = pneg %p213
        %p468 = pneg %p210
        %p469 = scmp.lt.s32.totalorder %s36, 1
        %s470 = scalar_select %p469, %s36, 1
        %p471 = scmp.lt.s32.totalorder %s37, 1
        %s472 = scalar_select %p471, %s37, 1
        %p473 = scmp.lt.s32.totalorder %s38, 2
        %s474 = scalar_select %p473, %s38, 2
        %s475 = smul.addr %s472, 3
        %s476 = sadd.s32 %s474, %s475
        %s477 = smul.addr %s470, 6
        %s478 = sadd.s32 %s476, %s477
        %s479 = smul.addr %s478, 8
        %s480 = scalar_lea.vmem %s7, %s479
        %p481 = pneg %p243
        %p482 = pneg %p240
        %p483 = pneg %p273
        %p484 = pneg %p270
        %s485 = sand.u32 %s260, 1
        %s486 = scalar_lea.sflag [#allocation6], %s485
        %s487 = sand.u32 %s260, 1
        %s488 = smul.addr %s487, 8
        %s489 = scalar_lea.vmem [#allocation10], %s488
        %p490 = pneg %p301
        %p491 = pneg %p298
        %s492 = sand.u32 %s288, 1
        %s493 = scalar_lea.sflag [#allocation12], %s492
        %s494 = sand.u32 %s288, 1
        %s495 = smul.addr %s494, 8
        %s496 = scalar_lea.vmem [#allocation11], %s495
        %p497 = scmp.lt.s32.totalorder %s36, 1
        %s498 = scalar_select %p497, %s36, 1
        %p499 = scmp.lt.s32.totalorder %s38, 2
        %s500 = scalar_select %p499, %s38, 2
        %s501 = smul.addr %s498, 3
        %s502 = sadd.s32 %s500, %s501
        %s503 = scalar_lea.vmem %s6, %s502
        %p504 = scmp.lt.s32.totalorder %s36, 1
        %s505 = scalar_select %p504, %s36, 1
        %p506 = scmp.lt.s32.totalorder %s37, 1
        %s507 = scalar_select %p506, %s37, 1
        %p508 = scmp.lt.s32.totalorder %s38, 2
        %s509 = scalar_select %p508, %s38, 2
        %s510 = smul.addr %s507, 3
        %s511 = sadd.s32 %s509, %s510
        %s512 = smul.addr %s505, 6
        %s513 = sadd.s32 %s511, %s512
        %s514 = smul.addr %s513, 8
        %s515 = scalar_lea.vmem %s7, %s514
        %p517 = scmp.eq.s32.totalorder %s38, 0
        // Predicated region
        $region65: #{tpu_custom_call.1} parent=51 // pred_check
          %p518 = pneg %p517
        $region66: #{tpu_custom_call.1} parent=51 // pred_check_branch
          %520 = sbr.rel (%p518) target = $region68
        $region67: #{tpu_custom_call.1} parent=51 // pred_region
          %v521 = vld [vmem:[%s420] sm:$0xff]
          %v522 = vld [vmem:[%s1] sm:$0xff]
          %v523 = vld [vmem:[%s1 + $0x8] sm:$0xff]
          %v524 = vld [vmem:[%s1 + $0x10] sm:$0xff]
          %v525 = vld [vmem:[%s1 + $0x18] sm:$0xff]
          %v526 = vld [vmem:[%s1 + $0x20] sm:$0xff]
          %v527 = vld [vmem:[%s1 + $0x28] sm:$0xff]
          %v528 = vld [vmem:[%s1 + $0x30] sm:$0xff]
          %v529 = vld [vmem:[%s1 + $0x38] sm:$0xff]
          %v530 = vld [vmem:[%s2] sm:$0x1]
          %v532 = vlaneseq
          %v533 = vshrl.u32 %v532, 7
          %v534 = vsub.s32 0, %v533
          %v535 = vrot.slane %v530, %v534
          %vm537 = vcmask 523264
          %v539 = vsel %vm537, %v521, 0
          %541 = vmatprep.subr.mxu0 0.0
          %542 = vmatpush1.msra.mxu0 %v522
          %543 = vmatprep.subr.mxu0 0.0
          %544 = vmatpush1.msra.mxu0 %v523
          %545 = vmatprep.subr.mxu0 0.0
          %546 = vmatpush1.msra.mxu0 %v524
          %547 = vmatprep.subr.mxu0 0.0
          %548 = vmatpush1.msra.mxu0 %v525
          %549 = vmatprep.subr.mxu0 0.0
          %550 = vmatpush1.msra.mxu0 %v526
          %551 = vmatprep.subr.mxu0 0.0
          %552 = vmatpush1.msra.mxu0 %v527
          %553 = vmatprep.subr.mxu0 0.0
          %554 = vmatpush1.msra.mxu0 %v528
          %555 = vmatprep.subr.mxu0 0.0
          %556 = vmatpush1.msra.mxu0 %v529
          %557 = vmatprep.subr.mxu0 0.0
          %558 = vmatpush1.msra.mxu0 0.0
          %559 = vmatprep.subr.mxu0 0.0
          %560 = vmatpush1.msra.mxu0 0.0
          %561 = vmatprep.subr.mxu0 0.0
          %562 = vmatpush1.msra.mxu0 0.0
          %563 = vmatprep.subr.mxu0 0.0
          %564 = vmatpush1.msra.mxu0 0.0
          %565 = vmatprep.subr.mxu0 0.0
          %566 = vmatpush1.msra.mxu0 0.0
          %567 = vmatprep.subr.mxu0 0.0
          %568 = vmatpush1.msra.mxu0 0.0
          %569 = vmatprep.subr.mxu0 0.0
          %570 = vmatpush1.msra.mxu0 0.0
          %571 = vmatprep.subr.mxu0 0.0
          %572 = vmatpush1.msra.mxu0 0.0
          %573 = vmatprep.subr.mxu0 0.0
          %574 = vmatpush1.msra.mxu0 0.0
          %575 = vmatprep.subr.mxu0 0.0
          %576 = vmatpush1.msra.mxu0 0.0
          %577 = vmatprep.subr.mxu0 0.0
          %578 = vmatpush1.msra.mxu0 0.0
          %579 = vmatprep.subr.mxu0 0.0
          %580 = vmatpush1.msra.mxu0 0.0
          %581 = vmatprep.subr.mxu0 0.0
          %582 = vmatpush1.msra.mxu0 0.0
          %583 = vmatprep.subr.mxu0 0.0
          %584 = vmatpush1.msra.mxu0 0.0
          %585 = vmatprep.subr.mxu0 0.0
          %586 = vmatpush1.msra.mxu0 0.0
          %587 = vmatprep.subr.mxu0 0.0
          %588 = vmatpush1.msra.mxu0 0.0
          %589 = vmatprep.subr.mxu0 0.0
          %590 = vmatpush1.msra.mxu0 0.0
          %591 = vmatprep.subr.mxu0 0.0
          %592 = vmatpush1.msra.mxu0 0.0
          %593 = vmatprep.subr.mxu0 0.0
          %594 = vmatpush1.msra.mxu0 0.0
          %595 = vmatprep.subr.mxu0 0.0
          %596 = vmatpush1.msra.mxu0 0.0
          %597 = vmatprep.subr.mxu0 0.0
          %598 = vmatpush1.msra.mxu0 0.0
          %599 = vmatprep.subr.mxu0 0.0
          %600 = vmatpush1.msra.mxu0 0.0
          %601 = vmatprep.subr.mxu0 0.0
          %602 = vmatpush1.msra.mxu0 0.0
          %603 = vmatprep.subr.mxu0 0.0
          %604 = vmatpush1.msra.mxu0 0.0
          %605 = vmatprep.mubr.f32.mxu0 0.0
          %606 = vmatmul.mubr.f32.gmra.mrb[0].mxu0 %v539
          %v607 = vpop.f32.mrb[0].mxu0
          %v608 = vadd.f32 %v535, %v607
          %v609 = vpop.f32.mrb[0].mxu0
          %610 = vdwg.mxu0
          %v611 = vld [vmem:[#allocation7] sm:$0xff]
          %v612 = vld [vmem:[#allocation7 + $0x8] sm:$0xff]
          %v613 = vld [vmem:[#allocation7 + $0x10] sm:$0xff]
          %v614 = vld [vmem:[#allocation7 + $0x18] sm:$0xff]
          %v615 = vld [vmem:[%s4] sm:$0x1]
          %v617 = vlaneseq
          %v618 = vshrl.u32 %v617, 7
          %v619 = vsub.s32 0, %v618
          %v620 = vrot.slane %v615, %v619
          %vm622 = vcmask 261120
          %v624 = vsel %vm622, %v608, 0
          %626 = vmatprep.subr.mxu0 0.0
          %627 = vmatpush1.msra.mxu0 %v611
          %628 = vmatprep.subr.mxu0 0.0
          %629 = vmatpush1.msra.mxu0 %v612
          %630 = vmatprep.subr.mxu0 0.0
          %631 = vmatpush1.msra.mxu0 %v613
          %632 = vmatprep.subr.mxu0 0.0
          %633 = vmatpush1.msra.mxu0 %v614
          %634 = vmatprep.subr.mxu0 0.0
          %635 = vmatpush1.msra.mxu0 0.0
          %636 = vmatprep.subr.mxu0 0.0
          %637 = vmatpush1.msra.mxu0 0.0
          %638 = vmatprep.subr.mxu0 0.0
          %639 = vmatpush1.msra.mxu0 0.0
          %640 = vmatprep.subr.mxu0 0.0
          %641 = vmatpush1.msra.mxu0 0.0
          %642 = vmatprep.subr.mxu0 0.0
          %643 = vmatpush1.msra.mxu0 0.0
          %644 = vmatprep.subr.mxu0 0.0
          %645 = vmatpush1.msra.mxu0 0.0
          %646 = vmatprep.subr.mxu0 0.0
          %647 = vmatpush1.msra.mxu0 0.0
          %648 = vmatprep.subr.mxu0 0.0
          %649 = vmatpush1.msra.mxu0 0.0
          %650 = vmatprep.subr.mxu0 0.0
          %651 = vmatpush1.msra.mxu0 0.0
          %652 = vmatprep.subr.mxu0 0.0
          %653 = vmatpush1.msra.mxu0 0.0
          %654 = vmatprep.subr.mxu0 0.0
          %655 = vmatpush1.msra.mxu0 0.0
          %656 = vmatprep.subr.mxu0 0.0
          %657 = vmatpush1.msra.mxu0 0.0
          %658 = vmatprep.subr.mxu0 0.0
          %659 = vmatpush1.msra.mxu0 0.0
          %660 = vmatprep.subr.mxu0 0.0
          %661 = vmatpush1.msra.mxu0 0.0
          %662 = vmatprep.subr.mxu0 0.0
          %663 = vmatpush1.msra.mxu0 0.0
          %664 = vmatprep.subr.mxu0 0.0
          %665 = vmatpush1.msra.mxu0 0.0
          %666 = vmatprep.subr.mxu0 0.0
          %667 = vmatpush1.msra.mxu0 0.0
          %668 = vmatprep.subr.mxu0 0.0
          %669 = vmatpush1.msra.mxu0 0.0
          %670 = vmatprep.subr.mxu0 0.0
          %671 = vmatpush1.msra.mxu0 0.0
          %672 = vmatprep.subr.mxu0 0.0
          %673 = vmatpush1.msra.mxu0 0.0
          %674 = vmatprep.subr.mxu0 0.0
          %675 = vmatpush1.msra.mxu0 0.0
          %676 = vmatprep.subr.mxu0 0.0
          %677 = vmatpush1.msra.mxu0 0.0
          %678 = vmatprep.subr.mxu0 0.0
          %679 = vmatpush1.msra.mxu0 0.0
          %680 = vmatprep.subr.mxu0 0.0
          %681 = vmatpush1.msra.mxu0 0.0
          %682 = vmatprep.subr.mxu0 0.0
          %683 = vmatpush1.msra.mxu0 0.0
          %684 = vmatprep.subr.mxu0 0.0
          %685 = vmatpush1.msra.mxu0 0.0
          %686 = vmatprep.subr.mxu0 0.0
          %687 = vmatpush1.msra.mxu0 0.0
          %688 = vmatprep.subr.mxu0 0.0
          %689 = vmatpush1.msra.mxu0 0.0
          %690 = vmatprep.mubr.f32.mxu0 0.0
          %691 = vmatmul.mubr.f32.gmra.mrb[0].mxu0 %v624
          %v692 = vpop.f32.mrb[0].mxu0
          %v693 = vadd.f32 %v620, %v692
          %v694 = vpop.f32.mrb[0].mxu0
          %695 = vdwg.mxu0
          %v696 = vpack.c.bf16 %v693, %v693
          %vm697 = vcmask 519168
          %698 = vst.msk [vmem:[#allocation2] sm:$0xf] %vm697, %v696
          %699 = vst [vmem:[#allocation3] sm:$0xff] 0.0
        $region68: #{tpu_custom_call.1} parent=51 // pred_fallthru
          _
        %v700 = vld [vmem:[#allocation2] sm:$0xf]
        %v701 = vld [vmem:[%s433] sm:$0xf]
        %v702 = vld [vmem:[%s433 + $0x4] sm:$0xf]
        %v703 = vld [vmem:[%s433 + $0x8] sm:$0xf]
        %v704 = vld [vmem:[%s433 + $0xc] sm:$0xf]
        %v705 = vld [vmem:[%s433 + $0x10] sm:$0xf]
        %v706 = vld [vmem:[%s433 + $0x14] sm:$0xf]
        %v707 = vld [vmem:[%s433 + $0x18] sm:$0xf]
        %v708 = vld [vmem:[%s433 + $0x1c] sm:$0xf]
        %v709 = vld [vmem:[%s503] sm:$0x1]
        %v711 = vlaneseq
        %v712 = vshrl.u32 %v711, 7
        %v713 = vsub.s32 0, %v712
        %v714 = vrot.slane %v709, %v713
        %v724 = vunpack.c.l.b16 %v701
        %v725 = vunpack.c.l.b16 %v702
        %v726 = vunpack.c.l.b16 %v703
        %v727 = vunpack.c.l.b16 %v704
        %v728 = vunpack.c.l.b16 %v705
        %v729 = vunpack.c.l.b16 %v706
        %v730 = vunpack.c.l.b16 %v707
        %v731 = vunpack.c.l.b16 %v708
        %v732 = vpack.c.b16 %v725, %v724
        %v733 = vpack.c.b16 %v727, %v726
        %v734 = vpack.c.b16 %v729, %v728
        %v735 = vpack.c.b16 %v731, %v730
        %vm740 = vcmask 523264
        %v742 = vsel %vm740, %v700, 0
        %744 = vmatprep.subr.bf16.mxu0 0
        %745 = vmatpush1.bf16.msra.mxu0 %v732
        %746 = vmatprep.subr.bf16.mxu0 0
        %747 = vmatpush1.bf16.msra.mxu0 %v733
        %748 = vmatprep.subr.bf16.mxu0 0
        %749 = vmatpush1.bf16.msra.mxu0 %v734
        %750 = vmatprep.subr.bf16.mxu0 0
        %751 = vmatpush1.bf16.msra.mxu0 %v735
        %752 = vmatprep.subr.bf16.mxu0 0
        %753 = vmatpush1.bf16.msra.mxu0 0
        %754 = vmatprep.subr.bf16.mxu0 0
        %755 = vmatpush1.bf16.msra.mxu0 0
        %756 = vmatprep.subr.bf16.mxu0 0
        %757 = vmatpush1.bf16.msra.mxu0 0
        %758 = vmatprep.subr.bf16.mxu0 0
        %759 = vmatpush1.bf16.msra.mxu0 0
        %760 = vmatprep.subr.bf16.mxu0 0
        %761 = vmatpush1.bf16.msra.mxu0 0
        %762 = vmatprep.subr.bf16.mxu0 0
        %763 = vmatpush1.bf16.msra.mxu0 0
        %764 = vmatprep.subr.bf16.mxu0 0
        %765 = vmatpush1.bf16.msra.mxu0 0
        %766 = vmatprep.subr.bf16.mxu0 0
        %767 = vmatpush1.bf16.msra.mxu0 0
        %768 = vmatprep.subr.bf16.mxu0 0
        %769 = vmatpush1.bf16.msra.mxu0 0
        %770 = vmatprep.subr.bf16.mxu0 0
        %771 = vmatpush1.bf16.msra.mxu0 0
        %772 = vmatprep.subr.bf16.mxu0 0
        %773 = vmatpush1.bf16.msra.mxu0 0
        %774 = vmatprep.subr.bf16.mxu0 0
        %775 = vmatpush1.bf16.msra.mxu0 0
        %776 = vmatprep.mubr.bf16.mxu0 0
        %777 = vmatmul.mubr.bf16.gmra.mrb[0].mxu0 %v742
        %v778 = vpop.f32.mrb[0].mxu0
        %v779 = vadd.f32 %v714, %v778
        %v780 = vpop.f32.mrb[0].mxu0
        %v781 = vpop.f32.mrb[0].mxu0
        %v782 = vpop.f32.mrb[0].mxu0
        %783 = vdwg.mxu0
        %784 = vst [vmem:[%s489] sm:$0xff] %v779
        %v785 = vld [vmem:[%s515] sm:$0xff]
        %v786 = vsub.f32 %v779, %v785
        %v787 = vmul.f32 %v786, %v786
        %788 = vadd.xlane.f32.xlu0 %v787
        %v789 = vpop.xlane.xlu0 %788
        %v790 = vrot.slane %v789, 4
        %v791 = vadd.f32 %v789, %v790
        %v792 = vrot.slane %v791, 2
        %v793 = vadd.f32 %v791, %v792
        %v794 = vrot.slane %v793, 1
        %v795 = vadd.f32 %v793, %v794
        %v796 = vld [vmem:[#allocation3] sm:$0xff]
        %v797 = vadd.f32 %v796, %v795
        %798 = vst [vmem:[#allocation3] sm:$0xff] %v797
        %p799 = scmp.eq.s32.totalorder %s38, 2
        // Predicated region
        $region69: #{tpu_custom_call.1} parent=51 // pred_check
          %p800 = pneg %p799
        $region70: #{tpu_custom_call.1} parent=51 // pred_check_branch
          %802 = sbr.rel (%p800) target = $region72
        $region71: #{tpu_custom_call.1} parent=51 // pred_region
          %v803 = vld [vmem:[#allocation3] sm:$0xff]
          %804 = vst [vmem:[%s496] sm:$0xff] %v803
        $region72: #{tpu_custom_call.1} parent=51 // pred_fallthru
          _
        %s805 = sand.u32 %s260, 1
        %s806 = scalar_lea.sflag [#allocation6], %s805
        %s807 = sand.u32 %s260, 1
        %s808 = smul.addr %s807, 8
        %s809 = scalar_lea.vmem [#allocation10], %s808
        %s810 = sand.u32 %s288, 1
        %s811 = scalar_lea.sflag [#allocation12], %s810
        %s812 = sand.u32 %s288, 1
        %s813 = smul.addr %s812, 8
        %s814 = scalar_lea.vmem [#allocation11], %s813
        // Predicated region
        $region73: #{tpu_custom_call.1} parent=51 // pred_check
          %p815 = pneg %p270
        $region74: #{tpu_custom_call.1} parent=51 // pred_check_branch
          %817 = sbr.rel (%p815) target = $region76
        $region75: #{tpu_custom_call.1} parent=51 // pred_region
          %s819 = ssub.s32 128, 128
          %820 = vsyncadd %s806, %s819
          %s821 = smul.addr %s37, 3
          %s822 = sadd.s32 %s38, %s821
          %s823 = smul.addr %s36, 6
          %s824 = sadd.s32 %s822, %s823
          %s825 = smul.addr %s824, 128
          %s826 = scalar_lea.hbm %s8, %s825
          %s828 = sshll.u32 %s809, 4
          %s829 = int_to_ptr.vmem [resolvable:$true] %s828
          %831 = dma.vmem_to_hbm [thread:$0]  %s829, 128, %s826, %s806
        $region76: #{tpu_custom_call.1} parent=51 // pred_fallthru
          _
        // Predicated region
        $region77: #{tpu_custom_call.1} parent=51 // pred_check
          %p832 = pneg %p298
        $region78: #{tpu_custom_call.1} parent=51 // pred_check_branch
          %834 = sbr.rel (%p832) target = $region80
        $region79: #{tpu_custom_call.1} parent=51 // pred_region
          %s836 = ssub.s32 128, 128
          %837 = vsyncadd %s811, %s836
          %s838 = smul.addr %s36, 2
          %s839 = sadd.s32 %s37, %s838
          %s840 = smul.addr %s839, 128
          %s841 = scalar_lea.hbm %s9, %s840
          %s843 = sshll.u32 %s814, 4
          %s844 = int_to_ptr.vmem [resolvable:$true] %s843
          %846 = dma.vmem_to_hbm [thread:$0]  %s844, 128, %s841, %s811
        $region80: #{tpu_custom_call.1} parent=51 // pred_fallthru
          _
      $region52: #{tpu_custom_call.1} parent=5 // pred_fallthru
        _
      %p847 = scmp.le.s32.totalorder 2, %s26
      // Predicated region
      $region81: #{tpu_custom_call.1} parent=5 // pred_check
        %p848 = pneg %p847
      $region82: #{tpu_custom_call.1} parent=5 // pred_check_branch
        %850 = sbr.rel (%p848) target = $region84
      $region83: #{tpu_custom_call.1} parent=5 // pred_region
        %s851 = ssub.s32 %s26, 2
        // Predicated region
        $region85: #{tpu_custom_call.1} parent=83 // pred_check
          %p852 = pneg %p276
        $region86: #{tpu_custom_call.1} parent=83 // pred_check_branch
          %854 = sbr.rel (%p852) target = $region88
        $region87: #{tpu_custom_call.1} parent=83 // pred_region
          %s855 = sand.u32 %s261, 1
          %s856 = scalar_lea.sflag [#allocation6], %s855
          %s857 = sand.u32 %s261, 1
          %s858 = smul.addr %s857, 8
          %s859 = scalar_lea.vmem [#allocation10], %s858
          %860 = dma.done %s856, 128
        $region88: #{tpu_custom_call.1} parent=83 // pred_fallthru
          _
        // Predicated region
        $region89: #{tpu_custom_call.1} parent=83 // pred_check
          %p861 = pneg %p304
        $region90: #{tpu_custom_call.1} parent=83 // pred_check_branch
          %863 = sbr.rel (%p861) target = $region92
        $region91: #{tpu_custom_call.1} parent=83 // pred_region
          %s864 = sand.u32 %s289, 1
          %s865 = scalar_lea.sflag [#allocation12], %s864
          %s866 = sand.u32 %s289, 1
          %s867 = smul.addr %s866, 8
          %s868 = scalar_lea.vmem [#allocation11], %s867
          %869 = dma.done %s865, 128
        $region92: #{tpu_custom_call.1} parent=83 // pred_fallthru
          _
      $region84: #{tpu_custom_call.1} parent=5 // pred_fallthru
        _
    $region6: #{tpu_custom_call.1} parent=1 // loop_footer
      %s30 = sadd.s32 1, %s26
    $region7: #{tpu_custom_call.1} parent=1 // loop_footer_branch
      %25 = sbr.rel target = $region3
    $region8: #{tpu_custom_call.1} parent=1 // loop_exit
      _
    %870 = vsyncpa [#allocation5], 1
    %s871 = scalar_lea.sflag [#allocation5], 1
    %872 = vsyncpa %s871, 1
    %873 = vsyncpa [#allocation8], 1
    %874 = vsyncpa [#allocation6], 1
    %s875 = scalar_lea.sflag [#allocation6], 1
    %876 = vsyncpa %s875, 1
    %877 = vsyncpa [#allocation12], 1
    %s878 = scalar_lea.sflag [#allocation12], 1
    %879 = vsyncpa %s878, 1

</llo_original>
